<compile_context>
chip_gen: v6e
topology: v6e:2x2x1
jax: 0.10.0
libtpu: 0.0.40
codegen_flags: <defaults>
</compile_context>

<pallas_src>
import functools
from math import factorial

import jax
import jax.numpy as jnp
from jax.experimental import pallas as pl
from jax.experimental.pallas import tpu as pltpu

LANE = 128
SUBLANE = 8
MAX_ROWS_PER_BLOCK = 1024          # 1024 * 128 = 128K elements per block (~0.5 MiB / row-slab)


def combination(m, n):
    return int(factorial(m) / (factorial(n) * factorial(m - n)))


def _round_up(n, m):
    return ((n + m - 1) // m) * m


def _cdiv(n, m):
    return (n + m - 1) // m


def _kernel(obs_ref, act_ref, w_ref, b_ref, out_ref, *, obs_dim, act_dim, feat_dim):
    # obs_ref: (obs_dim, rows, 128) VMEM   act_ref: (act_dim, rows, 128) VMEM
    # w_ref:   (feat_dim,) SMEM            b_ref:  (1,) SMEM
    # out_ref: (rows, 128) VMEM (lane-dense, full (8,128) vregs)
    in_dim = obs_dim + act_dim
    w = [w_ref[k] for k in range(feat_dim)]               # hoisted scalar reads (SMEM)

    def row(i):
        # Per-row ref indexing (no full-tile materialization, no non-view slices).
        if i < obs_dim:
            return obs_ref[i]
        return act_ref[i - obs_dim]

    xs = [row(i) for i in range(in_dim)]                   # each (rows, 128)

    # Horner-factored MAC, preserving make_features' (i<=j, i outer) weight ordering:
    #   q = b + sum_i x_i * (sum_{j>=i} w_k * x_j)
    acc = jnp.full(out_ref.shape, b_ref[0], jnp.float32)
    k = 0
    for i in range(in_dim):
        inner = w[k] * xs[i]
        k += 1
        for j in range(i + 1, in_dim):
            inner = inner + w[k] * xs[j]
            k += 1
        acc = acc + xs[i] * inner
    out_ref[...] = acc


def action_value_forward(obs, act, weight, bias):
    """obs: (B, obs_dim); act: (B, act_dim); weight: (1, feat_dim) [PyTorch layout]; bias: (1,)."""
    B, obs_dim = obs.shape
    Ba, act_dim = act.shape
    assert Ba == B and obs_dim >= 1 and act_dim >= 1
    in_dim = obs_dim + act_dim
    feat_dim = combination(2 + in_dim - 1, 2)
    out_dim, w_feat = weight.shape
    assert out_dim == 1 and w_feat == feat_dim, "degree-2 feature count mismatch"

    # Tile choice: full (8,128)-shaped blocks of up to 128K elements; guarantee >=2 grid
    # steps for non-trivial batches so v7x can shard the "parallel" axis over both TCs.
    total_rows0 = _cdiv(B, LANE)
    if total_rows0 <= 2 * SUBLANE:
        rows_block = total_rows0                       # single full-extent block (tiny batch)
    else:
        rows_block = min(MAX_ROWS_PER_BLOCK,
                         _round_up(_cdiv(total_rows0, 2), SUBLANE))
    num_blocks = _cdiv(total_rows0, rows_block)
    total_rows = num_blocks * rows_block
    b_pad = total_rows * LANE

    # Layout: batch on lanes. Transpose once per input (no concat copy), zero-pad to the
    # block multiple, free contiguous reshape to (dim, rows, 128).
    # TODO(synk): if activations arrive bf16, keep them bf16 in HBM and cast in-kernel.
    obs_t = obs.T.astype(jnp.float32)                  # (obs_dim, B)
    act_t = act.T.astype(jnp.float32)                  # (act_dim, B)
    if b_pad != B:
        obs_t = jnp.pad(obs_t, ((0, 0), (0, b_pad - B)))
        act_t = jnp.pad(act_t, ((0, 0), (0, b_pad - B)))
    obs_t = obs_t.reshape(obs_dim, total_rows, LANE)
    act_t = act_t.reshape(act_dim, total_rows, LANE)

    w_flat = weight.reshape(feat_dim).astype(jnp.float32)   # (feat_dim,) -> SMEM
    b_flat = bias.reshape(1).astype(jnp.float32)            # (1,)        -> SMEM

    kernel = functools.partial(_kernel, obs_dim=obs_dim, act_dim=act_dim, feat_dim=feat_dim)

    out = pl.pallas_call(
        kernel,
        out_shape=jax.ShapeDtypeStruct((total_rows, LANE), jnp.float32),
        grid_spec=pltpu.PrefetchScalarGridSpec(
            num_scalar_prefetch=0,
            grid=(num_blocks,),
            in_specs=[
                pl.BlockSpec((obs_dim, rows_block, LANE), lambda i: (0, i, 0)),
                pl.BlockSpec((act_dim, rows_block, LANE), lambda i: (0, i, 0)),
                pl.BlockSpec(memory_space=pltpu.MemorySpace.SMEM),
                pl.BlockSpec(memory_space=pltpu.MemorySpace.SMEM),
            ],
            out_specs=pl.BlockSpec((rows_block, LANE), lambda i: (i, 0)),
        ),
        compiler_params=pltpu.CompilerParams(
            dimension_semantics=("parallel",)),
    )(obs_t, act_t, w_flat, b_flat)

    return out.reshape(-1)[:B]                          # squeeze(-1) + drop padding


def _reference(obs, act, weight, bias):
    """Pure-JAX replica of cat + make_features(degree=2) + nn.Linear + squeeze."""
    x = jnp.concatenate([obs, act], axis=-1)
    n = x.shape[1]
    feats = []
    for i in range(n):
        for j in range(i, n):
            feats.append(x[:, i:i + 1] * x[:, j:j + 1])
    f = jnp.concatenate(feats, axis=1)
    return (f @ weight.T + bias[None, :])[:, 0]


if __name__ == "__main__":
    obs_dim, act_dim = 2, 1          # in_dim = 3 -> feat_dim = 6 == in_dim * degree
    degree = 2
    in_dim = obs_dim + act_dim
    feat_dim = combination(degree + in_dim - 1, degree)   # 6

    key = jax.random.PRNGKey(0)
    k_obs, k_act, k_w, k_b = jax.random.split(key, 4)

    # Deterministic synthetic nn.Linear params (PyTorch layout: (1, feat_dim)).
    bound = 1.0 / (feat_dim ** 0.5)
    weight = jax.random.uniform(k_w, (1, feat_dim), jnp.float32, -bound, bound)
    bias = jax.random.uniform(k_b, (1,), jnp.float32, -bound, bound)

    # Small-batch check (single full-extent block).
    batch = 8
    obs = jax.random.normal(k_obs, (batch, obs_dim), dtype=jnp.float32)
    act = jax.random.normal(k_act, (batch, act_dim), dtype=jnp.float32)
    q = jax.block_until_ready(action_value_forward(obs, act, weight, bias))
    ref = _reference(obs, act, weight, bias)
    assert q.shape == (batch,)
    assert jnp.allclose(q, ref, atol=1e-5, rtol=1e-5), "mismatch vs reference (small batch)"

    # Multi-block check (exercises padding + >=2 grid steps path).
    batch2 = 4200
    obs2 = jax.random.normal(k_obs, (batch2, obs_dim), dtype=jnp.float32)
    act2 = jax.random.normal(k_act, (batch2, act_dim), dtype=jnp.float32)
    q2 = jax.block_until_ready(action_value_forward(obs2, act2, weight, bias))
    ref2 = _reference(obs2, act2, weight, bias)
    assert q2.shape == (batch2,)
    assert jnp.allclose(q2, ref2, atol=1e-5, rtol=1e-5), "mismatch vs reference (multi-block)"

    print("KERNEL_OK")
</pallas_src>

<mosaic_0001>
module attributes {stable_mosaic.version = 11 : i64} {
  func.func @_kernel(%arg0: i32, %arg1: memref<2x1x128xf32, #tpu.memory_space<vmem>>, %arg2: memref<1x1x128xf32, #tpu.memory_space<vmem>>, %arg3: memref<6xf32, #tpu.memory_space<smem>>, %arg4: memref<1xf32, #tpu.memory_space<smem>>, %arg5: memref<1x128xf32, #tpu.memory_space<vmem>>) attributes {dimension_semantics = [#tpu.dimension_semantics<parallel>], iteration_bounds = array<i64: 1>, scalar_prefetch = 0 : i64, scratch_operands = 0 : i64, tpu.core_type = #tpu.core_type<tc>, window_params = [{transform_indices = @transform_0, window_bounds = array<i64: 2, 1, 128>}, {transform_indices = @transform_1, window_bounds = array<i64: 1, 1, 128>}, {transform_indices = @transform_2, window_bounds = array<i64: 6>}, {transform_indices = @transform_3, window_bounds = array<i64: 1>}, {transform_indices = @transform_4, window_bounds = array<i64: 1, 128>}]} {
    %c0 = arith.constant 0 : index
    %0 = memref.load %arg3[%c0] : memref<6xf32, #tpu.memory_space<smem>>
    %c1 = arith.constant 1 : index
    %1 = memref.load %arg3[%c1] : memref<6xf32, #tpu.memory_space<smem>>
    %c2 = arith.constant 2 : index
    %2 = memref.load %arg3[%c2] : memref<6xf32, #tpu.memory_space<smem>>
    %c3 = arith.constant 3 : index
    %3 = memref.load %arg3[%c3] : memref<6xf32, #tpu.memory_space<smem>>
    %c4 = arith.constant 4 : index
    %4 = memref.load %arg3[%c4] : memref<6xf32, #tpu.memory_space<smem>>
    %c5 = arith.constant 5 : index
    %5 = memref.load %arg3[%c5] : memref<6xf32, #tpu.memory_space<smem>>
    %c0_0 = arith.constant 0 : index
    %c0_1 = arith.constant 0 : index
    %c0_2 = arith.constant 0 : index
    %6 = vector.load %arg1[%c0_0, %c0_1, %c0_2] : memref<2x1x128xf32, #tpu.memory_space<vmem>>, vector<1x1x128xf32>
    %7 = vector.shape_cast %6 : vector<1x1x128xf32> to vector<1x128xf32>
    %c1_3 = arith.constant 1 : index
    %c0_4 = arith.constant 0 : index
    %c0_5 = arith.constant 0 : index
    %8 = vector.load %arg1[%c1_3, %c0_4, %c0_5] : memref<2x1x128xf32, #tpu.memory_space<vmem>>, vector<1x1x128xf32>
    %9 = vector.shape_cast %8 : vector<1x1x128xf32> to vector<1x128xf32>
    %c0_6 = arith.constant 0 : index
    %c0_7 = arith.constant 0 : index
    %c0_8 = arith.constant 0 : index
    %10 = vector.load %arg2[%c0_6, %c0_7, %c0_8] : memref<1x1x128xf32, #tpu.memory_space<vmem>>, vector<1x1x128xf32>
    %11 = vector.shape_cast %10 : vector<1x1x128xf32> to vector<1x128xf32>
    %c0_9 = arith.constant 0 : index
    %12 = memref.load %arg4[%c0_9] : memref<1xf32, #tpu.memory_space<smem>>
    %13 = vector.broadcast %12 : f32 to vector<1x128xf32>
    %14 = vector.broadcast %0 : f32 to vector<1x128xf32>
    %15 = arith.mulf %14, %7 : vector<1x128xf32>
    %16 = vector.broadcast %1 : f32 to vector<1x128xf32>
    %17 = arith.mulf %16, %9 : vector<1x128xf32>
    %18 = arith.addf %15, %17 : vector<1x128xf32>
    %19 = vector.broadcast %2 : f32 to vector<1x128xf32>
    %20 = arith.mulf %19, %11 : vector<1x128xf32>
    %21 = arith.addf %18, %20 : vector<1x128xf32>
    %22 = arith.mulf %7, %21 : vector<1x128xf32>
    %23 = arith.addf %13, %22 : vector<1x128xf32>
    %24 = vector.broadcast %3 : f32 to vector<1x128xf32>
    %25 = arith.mulf %24, %9 : vector<1x128xf32>
    %26 = vector.broadcast %4 : f32 to vector<1x128xf32>
    %27 = arith.mulf %26, %11 : vector<1x128xf32>
    %28 = arith.addf %25, %27 : vector<1x128xf32>
    %29 = arith.mulf %9, %28 : vector<1x128xf32>
    %30 = arith.addf %23, %29 : vector<1x128xf32>
    %31 = vector.broadcast %5 : f32 to vector<1x128xf32>
    %32 = arith.mulf %31, %11 : vector<1x128xf32>
    %33 = arith.mulf %11, %32 : vector<1x128xf32>
    %34 = arith.addf %30, %33 : vector<1x128xf32>
    %c0_10 = arith.constant 0 : index
    %c0_11 = arith.constant 0 : index
    %35 = vector.load %arg5[%c0_10, %c0_11] : memref<1x128xf32, #tpu.memory_space<vmem>>, vector<1x128xf32>
    tpu.vector_store %arg5[%c0_10, %c0_11], %34 {strides = array<i32>} : memref<1x128xf32, #tpu.memory_space<vmem>>, vector<1x128xf32>,
    return
  }
  func.func @transform_0(%arg0: i32) -> (i32, i32, i32) {
    %c0_i32 = arith.constant 0 : i32
    %c0_i32_0 = arith.constant 0 : i32
    %c0_i32_1 = arith.constant 0 : i32
    return %c0_i32, %arg0, %c0_i32_0 : i32, i32, i32
  }
  func.func @transform_1(%arg0: i32) -> (i32, i32, i32) {
    %c0_i32 = arith.constant 0 : i32
    %c0_i32_0 = arith.constant 0 : i32
    %c0_i32_1 = arith.constant 0 : i32
    return %c0_i32, %arg0, %c0_i32_0 : i32, i32, i32
  }
  func.func @transform_2(%arg0: i32) -> i32 {
    %c0_i32 = arith.constant 0 : i32
    %c0_i32_0 = arith.constant 0 : i32
    return %c0_i32 : i32
  }
  func.func @transform_3(%arg0: i32) -> i32 {
    %c0_i32 = arith.constant 0 : i32
    %c0_i32_0 = arith.constant 0 : i32
    return %c0_i32 : i32
  }
  func.func @transform_4(%arg0: i32) -> (i32, i32) {
    %c0_i32 = arith.constant 0 : i32
    %c0_i32_0 = arith.constant 0 : i32
    return %arg0, %c0_i32 : i32, i32
  }
}

</mosaic_0001>

<llo_original>
// kernel: tpu_custom_call.1
$region0: #{tpu_custom_call.1}
  #allocation0 [shape = 'u32[]', space=smem, size = 0x4, offset = 0x4, fixed_abs, tag = 'smem constant byte address 0x4 - core index']
  #allocation1 [shape = 'u32[144,128]{1,0:T(1,128)}', space=vmem, size = 0x12000, scoped, tag = 'internal scratch']
  #allocation2 [shape = 'f32[1]{0:T(128)S(6)}', space=smem, size = 0x200, scoped, tag = 'scoped memory for tpu_custom_call.1']
  %s0 = inlined_call_operand.vmem [shape: f32[2,1,128], index: 0, kind: input, shape index: {}]
  %s1 = inlined_call_operand.vmem [shape: f32[1,1,128], index: 1, kind: input, shape index: {}]
  %s2 = inlined_call_operand.vmem [shape: f32[6], index: 2, kind: input, shape index: {}]
  %s3 = inlined_call_operand.<no memory space> [shape: f32[1], index: 3, kind: input, shape index: {}]
  %s4 = inlined_call_operand.hbm [shape: f32[1,128], index: 4, kind: output, shape index: {}]
  %s5 = sld [smem:[#allocation0]]
  $region30: #{tpu_custom_call.1} parent=0
    _
  %s7 = ssub.s32 1, %s5
  %s8 = scalar_select 0, %s7, %s5
  %9 = sst [smem:[#allocation2]] %s3
  $region1: #{tpu_custom_call.1} parent=0
    #allocation3 [shape = 'u8[512]{0}', space=smem, size = 0x200, scoped, tag = 'input window, operand 2, single buffered']
    #allocation4 [shape = 's32[1]{0}', space=sflag, size = 0x4, scoped, tag = 'scoped memory for tpu_custom_call.1']
    #allocation5 [shape = 's32[1]{0}', space=sflag, size = 0x4, scoped, tag = 'scoped memory for tpu_custom_call.1']
    #allocation6 [shape = 'u8[512]{0}', space=vmem, size = 0x400, scoped, tag = 'output window, operand 0, single buffered']
    %10 = vsyncpa [#allocation5], 0
    %11 = vsyncpa [#allocation4], 0
    // Predicated region
    $region2: #{tpu_custom_call.1} parent=1 // pred_check
      _
    $region3: #{tpu_custom_call.1} parent=1 // pred_check_branch
      %13 = sbr.rel (0) target = $region5
    $region4: #{tpu_custom_call.1} parent=1 // pred_region
      _
    $region5: #{tpu_custom_call.1} parent=1 // pred_fallthru
      _
    // Predicated region
    $region6: #{tpu_custom_call.1} parent=1 // pred_check
      _
    $region7: #{tpu_custom_call.1} parent=1 // pred_check_branch
      %15 = sbr.rel (0) target = $region9
    $region8: #{tpu_custom_call.1} parent=1 // pred_region
      _
    $region9: #{tpu_custom_call.1} parent=1 // pred_fallthru
      _
    // Predicated region
    $region10: #{tpu_custom_call.1} parent=1 // pred_check
      _
    $region11: #{tpu_custom_call.1} parent=1 // pred_check_branch
      %17 = sbr.rel (0) target = $region13
    $region12: #{tpu_custom_call.1} parent=1 // pred_region
      %s19 = ssub.s32 16, 16
      %20 = vsyncadd [#allocation5], %s19
      %s22 = sshll.u32 %s2, 4
      %s23 = int_to_ptr.vmem [resolvable:$true] %s22
      %25 = dma.vmem_to_smem %s23, 16, [#allocation3], [#allocation5]
    $region13: #{tpu_custom_call.1} parent=1 // pred_fallthru
      _
    // Predicated region
    $region14: #{tpu_custom_call.1} parent=1 // pred_check
      _
    $region15: #{tpu_custom_call.1} parent=1 // pred_check_branch
      %27 = sbr.rel (0) target = $region17
    $region16: #{tpu_custom_call.1} parent=1 // pred_region
      _
    $region17: #{tpu_custom_call.1} parent=1 // pred_fallthru
      _
    // Predicated region
    $region18: #{tpu_custom_call.1} parent=1 // pred_check
      _
    $region19: #{tpu_custom_call.1} parent=1 // pred_check_branch
      %29 = sbr.rel (0) target = $region21
    $region20: #{tpu_custom_call.1} parent=1 // pred_region
      %30 = dma.done [#allocation5], 16
    $region21: #{tpu_custom_call.1} parent=1 // pred_fallthru
      _
    %31 = sfence
    %s32 = sld [smem:[#allocation3]]
    %s33 = sld [smem:[#allocation3 + $0x1]]
    %s34 = sld [smem:[#allocation3 + $0x2]]
    %s35 = sld [smem:[#allocation3 + $0x3]]
    %s36 = sld [smem:[#allocation3 + $0x4]]
    %s37 = sld [smem:[#allocation3 + $0x5]]
    %v38 = vld [vmem:[%s0] sm:$0x1]
    %s39 = scalar_lea.vmem %s0, 1
    %v40 = vld [vmem:[%s39] sm:$0x1]
    %v41 = vld [vmem:[%s1] sm:$0x1]
    %s42 = sld [smem:[#allocation2]]
    %v43 = vstv %s42
    %v44 = vstv %s32
    %v45 = vmul.f32 %v44, %v38
    %v46 = vstv %s33
    %v47 = vmul.f32 %v46, %v40
    %v48 = vadd.f32 %v45, %v47
    %v49 = vstv %s34
    %v50 = vmul.f32 %v49, %v41
    %v51 = vadd.f32 %v48, %v50
    %v52 = vmul.f32 %v38, %v51
    %v53 = vadd.f32 %v43, %v52
    %v54 = vstv %s35
    %v55 = vmul.f32 %v54, %v40
    %v56 = vstv %s36
    %v57 = vmul.f32 %v56, %v41
    %v58 = vadd.f32 %v55, %v57
    %v59 = vmul.f32 %v40, %v58
    %v60 = vadd.f32 %v53, %v59
    %v61 = vstv %s37
    %v62 = vmul.f32 %v61, %v41
    %v63 = vmul.f32 %v41, %v62
    %v64 = vadd.f32 %v60, %v63
    %65 = vst [vmem:[#allocation6] sm:$0x1] %v64
    // Predicated region
    $region22: #{tpu_custom_call.1} parent=1 // pred_check
      _
    $region23: #{tpu_custom_call.1} parent=1 // pred_check_branch
      %67 = sbr.rel (0) target = $region25
    $region24: #{tpu_custom_call.1} parent=1 // pred_region
      %s69 = ssub.s32 16, 16
      %70 = vsyncadd [#allocation4], %s69
      %s72 = sshll.u32 [#allocation6], 4
      %s73 = int_to_ptr.vmem [resolvable:$true] %s72
      %75 = dma.vmem_to_hbm [thread:$0]  %s73, 16, %s4, [#allocation4]
    $region25: #{tpu_custom_call.1} parent=1 // pred_fallthru
      _
    // Predicated region
    $region26: #{tpu_custom_call.1} parent=1 // pred_check
      _
    $region27: #{tpu_custom_call.1} parent=1 // pred_check_branch
      %77 = sbr.rel (0) target = $region29
    $region28: #{tpu_custom_call.1} parent=1 // pred_region
      %78 = dma.done [#allocation4], 16
    $region29: #{tpu_custom_call.1} parent=1 // pred_fallthru
      _
    %79 = vsyncpa [#allocation4], 1
    %80 = vsyncpa [#allocation5], 1

</llo_original>
